<compile_context>
chip_gen: v5e
topology: v5e:2x2
jax: 0.10.0
libtpu: 0.0.40
codegen_flags: <defaults>
</compile_context>

<pallas_src>
import numpy as np
import jax
import jax.numpy as jnp
from jax.experimental import pallas as pl
from jax.experimental.pallas import tpu as pltpu

TEMPERATURE = 0.07
_INV_TEMP = np.float32(1.0 / TEMPERATURE)
_NEG_INF = np.float32(-1e30)
_TM = 128      # anchor rows per grid step
_LANE = 128    # lane width


def _round_up(x, m):
    return (x + m - 1) // m * m


# ----------------------------------------------------------------------------
# Label construction (host-side Python glue, faithful port of make_posneg_label)
# ----------------------------------------------------------------------------
def make_posneg_label(indices_ex, bs, n_frames):
    """Same-person labels, unique per clip, offset by #people in previous clips."""
    labels = []
    offset = 0
    for i in range(bs):
        clip = indices_ex[i * n_frames:(i + 1) * n_frames]
        ids = np.concatenate([np.asarray(psn_id) for _, _, psn_id in clip])
        uniq = sorted(np.unique(ids).tolist())
        labels.extend([uniq.index(int(x)) + offset for x in ids])
        offset += len(uniq)
    return np.asarray(labels, dtype=np.int64)


# ----------------------------------------------------------------------------
# Kernel 1: cosine normalization (row tiled), bf16 output feeds the MXU.
# ----------------------------------------------------------------------------
def _normalize_kernel(emb_ref, out_ref):
    x = emb_ref[...].astype(jnp.float32)
    sq = jnp.sum(x * x, axis=-1, keepdims=True)
    # F.normalize(eps=1e-12): x / max(||x||, 1e-12) == x * rsqrt(max(||x||^2, 1e-24))
    inv = jax.lax.rsqrt(jnp.maximum(sq, 1e-24))
    out_ref[...] = (x * inv).astype(out_ref.dtype)


# ----------------------------------------------------------------------------
# Kernel 2: per-row-tile NT-Xent over the (TM, N) similarity slab.
# ----------------------------------------------------------------------------
def _ntxent_tile_kernel(xn_tile_ref, xn_all_ref, lab_col_ref, lab_row_ref,
                        tot_ref, cnt_ref):
    tm = xn_tile_ref.shape[0]
    n_pad = xn_all_ref.shape[0]
    row0 = pl.program_id(0) * tm

    # bf16 x bf16 -> f32 on the MXU, scaled by 1/temperature.
    sim = jax.lax.dot_general(
        xn_tile_ref[...], xn_all_ref[...],
        (((1,), (1,)), ((), ())),
        preferred_element_type=jnp.float32) * _INV_TEMP            # (TM, N)

    lab_i = lab_col_ref[...]                                       # (TM, 1), -1 = pad
    lab_j = lab_row_ref[...]                                       # (1, N),  -1 = pad
    valid_i = lab_i >= 0
    valid_j = lab_j >= 0
    same = lab_i == lab_j
    row_ids = jax.lax.broadcasted_iota(jnp.int32, (tm, n_pad), 0) + row0
    col_ids = jax.lax.broadcasted_iota(jnp.int32, (tm, n_pad), 1)
    not_diag = row_ids != col_ids

    # same & valid_i implies valid_j (pad labels are -1), so positives need no extra term.
    pos_mask = jnp.logical_and(jnp.logical_and(same, not_diag), valid_i)
    neg_mask = jnp.logical_and(jnp.logical_and(jnp.logical_not(same), valid_i), valid_j)

    # Numerically stable per-anchor sum over negatives.
    neg_sim = jnp.where(neg_mask, sim, _NEG_INF)
    row_neg_max = jnp.max(neg_sim, axis=-1, keepdims=True)          # (TM, 1)
    neg_sum = jnp.sum(jnp.where(neg_mask, jnp.exp(neg_sim - row_neg_max), 0.0),
                      axis=-1, keepdims=True)                       # (TM, 1)

    # NT-Xent per positive pair, algebraically simplified (no divide, 1 fewer exp):
    #   -log(exp(s_ij - m) / (sum_neg exp(s_ik - m) + exp(s_ij - m)))
    #     = log(1 + neg_sum_i * exp(row_neg_max_i - s_ij))
    z = neg_sum * jnp.exp(row_neg_max - sim)
    losses = jnp.log(1.0 + z)

    total = jnp.sum(jnp.where(pos_mask, losses, 0.0))
    count = jnp.sum(pos_mask.astype(jnp.float32))

    # Lane-dense partial outputs (one (8,128) block per tile); reduced in wrapper.
    tot_ref[...] = jnp.broadcast_to(total, tot_ref.shape)
    cnt_ref[...] = jnp.broadcast_to(count, cnt_ref.shape)


# ----------------------------------------------------------------------------
# Wrapper
# ----------------------------------------------------------------------------
def set_infonce_loss(p_f_queries, labels):
    """NT-Xent (temp=0.07, cosine sim, all pos/neg pairs, mean over positive pairs)."""
    n, d = p_f_queries.shape
    n_pad = _round_up(n, _TM)
    d_pad = _round_up(d, _LANE)
    num_tiles = n_pad // _TM

    # Zero-padding D is exact for cosine similarity; padded rows get label -1.
    emb = jnp.pad(p_f_queries, ((0, n_pad - n), (0, d_pad - d)))
    lab = jnp.pad(labels.astype(jnp.int32), (0, n_pad - n), constant_values=-1)

    # Pass 1: normalize once; bf16 output halves VMEM traffic and feeds MXU natively.
    xn = pl.pallas_call(
        _normalize_kernel,
        out_shape=jax.ShapeDtypeStruct((n_pad, d_pad), jnp.bfloat16),
        grid=(num_tiles,),
        in_specs=[pl.BlockSpec((_TM, d_pad), lambda i: (i, 0))],
        out_specs=pl.BlockSpec((_TM, d_pad), lambda i: (i, 0)),
        compiler_params=pltpu.CompilerParams(dimension_semantics=("parallel",)),
    )(emb)

    lab_col = lab.reshape(n_pad, 1)
    lab_row = lab.reshape(1, n_pad)

    # Pass 2: row-tiled similarity + loss epilogue; per-tile partial sums.
    part_tot, part_cnt = pl.pallas_call(
        _ntxent_tile_kernel,
        out_shape=(jax.ShapeDtypeStruct((num_tiles, 8, _LANE), jnp.float32),
                   jax.ShapeDtypeStruct((num_tiles, 8, _LANE), jnp.float32)),
        grid=(num_tiles,),
        in_specs=[
            pl.BlockSpec((_TM, d_pad), lambda i: (i, 0)),     # anchor row tile (bf16)
            pl.BlockSpec((n_pad, d_pad), lambda i: (0, 0)),   # all rows (resident)
            pl.BlockSpec((_TM, 1), lambda i: (i, 0)),         # labels, column form
            pl.BlockSpec((1, n_pad), lambda i: (0, 0)),       # labels, row form
        ],
        out_specs=(pl.BlockSpec((1, 8, _LANE), lambda i: (i, 0, 0)),
                   pl.BlockSpec((1, 8, _LANE), lambda i: (i, 0, 0))),
        compiler_params=pltpu.CompilerParams(
            dimension_semantics=("parallel",),      # row tiles shard across TCs on v7x
            vmem_limit_bytes=48 * 1024 * 1024,      # > 16/32 MiB defaults, < 64 MiB v7x
        ),
    )(xn, xn, lab_col, lab_row)

    total = jnp.sum(part_tot[:, 0, 0])
    count = jnp.sum(part_cnt[:, 0, 0])
    # MeanReducer returns 0 for an empty reduction (no positive pairs).
    return jnp.where(count > 0, total / jnp.maximum(count, 1.0), jnp.float32(0.0))


def set_infonce_forward(p_f_queries, indices_ex, bs, n_frames):
    label_np = make_posneg_label(indices_ex, bs, n_frames)
    # int64 in torch; JAX (x64 disabled) keeps int32 — values are small indices, lossless.
    label = jnp.asarray(label_np)
    loss = set_infonce_loss(p_f_queries, jnp.asarray(label_np, dtype=jnp.int32))
    return loss, label


# ----------------------------------------------------------------------------
# Pure-JAX reference (for sanity checking only)
# ----------------------------------------------------------------------------
def _reference_loss(x, labels):
    x = x.astype(jnp.float32)
    xn = x / jnp.maximum(jnp.linalg.norm(x, axis=-1, keepdims=True), 1e-12)
    sim = (xn @ xn.T) / TEMPERATURE
    lab = labels.reshape(-1, 1)
    same = lab == lab.T
    eye = jnp.eye(x.shape[0], dtype=bool)
    pos = same & ~eye
    neg = ~same
    neg_sim = jnp.where(neg, sim, _NEG_INF)
    m = jnp.max(neg_sim, axis=-1, keepdims=True)
    neg_sum = jnp.sum(jnp.where(neg, jnp.exp(neg_sim - m), 0.0), axis=-1, keepdims=True)
    losses = jnp.log1p(neg_sum * jnp.exp(m - sim))
    cnt = jnp.sum(pos)
    return jnp.where(cnt > 0, jnp.sum(jnp.where(pos, losses, 0.0)) / jnp.maximum(cnt, 1), 0.0)


if __name__ == "__main__":
    # bs=2 clips, n_frames=2, 2 detected persons per frame -> N=8 queries, D=32.
    bs, n_frames, d = 2, 2, 32

    # indices_ex: list of (index_i, index_j, psn_id) per frame; only psn_id is used.
    indices_ex = [
        (np.array([0, 1]), np.array([0, 1]), np.array([5, 9])),   # clip0, frame0
        (np.array([0, 1]), np.array([1, 0]), np.array([9, 5])),   # clip0, frame1
        (np.array([0, 1]), np.array([0, 1]), np.array([3, 7])),   # clip1, frame0
        (np.array([0, 1]), np.array([1, 0]), np.array([7, 3])),   # clip1, frame1
    ]
    n_total = sum(len(t[2]) for t in indices_ex)  # 8

    key = jax.random.PRNGKey(0)
    p_f_queries = jax.random.normal(key, (n_total, d), dtype=jnp.float32)

    loss, label = set_infonce_forward(p_f_queries, indices_ex, bs, n_frames)
    loss = jax.block_until_ready(loss)

    assert np.isfinite(np.asarray(loss)), "loss is not finite"
    assert label.shape == (n_total,)

    ref = np.asarray(jax.block_until_ready(
        _reference_loss(p_f_queries, jnp.asarray(label, dtype=jnp.int32))))
    err = abs(float(loss) - float(ref))
    assert err <= 0.05 * abs(float(ref)) + 0.05, f"kernel {float(loss)} vs ref {float(ref)}"

    print("KERNEL_OK")
</pallas_src>

<mosaic_0001>
module attributes {stable_mosaic.version = 11 : i64} {
  func.func @_normalize_kernel(%arg0: i32, %arg1: memref<128x128xf32, #tpu.memory_space<vmem>>, %arg2: memref<128x128xbf16, #tpu.memory_space<vmem>>) attributes {dimension_semantics = [#tpu.dimension_semantics<parallel>], iteration_bounds = array<i64: 1>, scalar_prefetch = 0 : i64, scratch_operands = 0 : i64, tpu.core_type = #tpu.core_type<tc>, window_params = [{transform_indices = @transform_0, window_bounds = array<i64: 128, 128>}, {transform_indices = @transform_1, window_bounds = array<i64: 128, 128>}]} {
    %c0 = arith.constant 0 : index
    %c0_0 = arith.constant 0 : index
    %0 = vector.load %arg1[%c0, %c0_0] : memref<128x128xf32, #tpu.memory_space<vmem>>, vector<128x128xf32>
    %1 = arith.mulf %0, %0 : vector<128x128xf32>
    %cst = arith.constant dense<0.000000e+00> : vector<128xf32>
    %2 = vector.multi_reduction <add>, %1, %cst [1] : vector<128x128xf32> to vector<128xf32>
    %3 = vector.shape_cast %2 : vector<128xf32> to vector<128x1xf32>
    %cst_1 = arith.constant 1.000000e-24 : f32
    %4 = vector.broadcast %cst_1 : f32 to vector<128x1xf32>
    %5 = arith.maximumf %3, %4 : vector<128x1xf32>
    %6 = math.rsqrt %5 : vector<128x1xf32>
    %7 = vector.broadcast %6 : vector<128x1xf32> to vector<128x128xf32>
    %8 = arith.mulf %0, %7 : vector<128x128xf32>
    %9 = arith.truncf %8 : vector<128x128xf32> to vector<128x128xbf16>
    %c0_2 = arith.constant 0 : index
    %c0_3 = arith.constant 0 : index
    %10 = vector.load %arg2[%c0_2, %c0_3] : memref<128x128xbf16, #tpu.memory_space<vmem>>, vector<128x128xbf16>
    tpu.vector_store %arg2[%c0_2, %c0_3], %9 {strides = array<i32>} : memref<128x128xbf16, #tpu.memory_space<vmem>>, vector<128x128xbf16>,
    return
  }
  func.func @transform_0(%arg0: i32) -> (i32, i32) {
    %c0_i32 = arith.constant 0 : i32
    %c0_i32_0 = arith.constant 0 : i32
    return %arg0, %c0_i32 : i32, i32
  }
  func.func @transform_1(%arg0: i32) -> (i32, i32) {
    %c0_i32 = arith.constant 0 : i32
    %c0_i32_0 = arith.constant 0 : i32
    return %arg0, %c0_i32 : i32, i32
  }
}

</mosaic_0001>

<llo_original>
// kernel: tpu_custom_call.1
$region0: #{tpu_custom_call.1}
  #allocation0 [shape = 'u32[]', space=smem, size = 0x4, offset = 0x4, fixed_abs, tag = 'smem constant byte address 0x4 - core index']
  #allocation1 [shape = 'u32[72,128]{1,0:T(1,128)}', space=vmem, size = 0x9000, scoped, tag = 'internal scratch']
  %s0 = inlined_call_operand.hbm [shape: f32[128,128], index: 0, kind: input, shape index: {}]
  %s1 = inlined_call_operand.hbm [shape: bf16[128,128], index: 1, kind: output, shape index: {}]
  %s2 = sld [smem:[#allocation0]]
  $region18: #{tpu_custom_call.1} parent=0
    _
  %s4 = ssub.s32 1, %s2
  %s5 = scalar_select 0, %s4, %s2
  $region1: #{tpu_custom_call.1} parent=0
    #allocation2 [shape = 'u8[65536]{0}', space=vmem, size = 0x10000, scoped, tag = 'input window, operand 0, single buffered']
    #allocation3 [shape = 's32[1]{0}', space=sflag, size = 0x4, scoped, tag = 'scoped memory for tpu_custom_call.1']
    #allocation4 [shape = 's32[1]{0}', space=sflag, size = 0x4, scoped, tag = 'scoped memory for tpu_custom_call.1']
    #allocation5 [shape = 'u8[32768]{0}', space=vmem, size = 0x8000, scoped, tag = 'output window, operand 0, single buffered']
    %6 = vsyncpa [#allocation3], 0
    %7 = vsyncpa [#allocation4], 0
    // Predicated region
    $region2: #{tpu_custom_call.1} parent=1 // pred_check
      _
    $region3: #{tpu_custom_call.1} parent=1 // pred_check_branch
      %9 = sbr.rel (0) target = $region5
    $region4: #{tpu_custom_call.1} parent=1 // pred_region
      %11 = vsyncadd [#allocation3], 0
      %s12 = sshll.u32 %s0, 4
      %s13 = int_to_ptr.hbm [resolvable:$true] %s12
      %s14 = sshll.u32 [#allocation2], 4
      %s15 = int_to_ptr.vmem [resolvable:$true] %s14
      %20 = dma.hbm_to_vmem [thread:$0]  %s13, 2048, %s15, [#allocation3], 128, 128, 8
    $region5: #{tpu_custom_call.1} parent=1 // pred_fallthru
      _
    // Predicated region
    $region6: #{tpu_custom_call.1} parent=1 // pred_check
      _
    $region7: #{tpu_custom_call.1} parent=1 // pred_check_branch
      %22 = sbr.rel (0) target = $region9
    $region8: #{tpu_custom_call.1} parent=1 // pred_region
      %24 = dma.done [#allocation3], 2048
    $region9: #{tpu_custom_call.1} parent=1 // pred_fallthru
      _
    %v25 = vld [vmem:[#allocation2] sm:$0xff]
    %v26 = vld [vmem:[#allocation2 + $0x8] sm:$0xff]
    %v27 = vld [vmem:[#allocation2 + $0x10] sm:$0xff]
    %v28 = vld [vmem:[#allocation2 + $0x18] sm:$0xff]
    %v29 = vld [vmem:[#allocation2 + $0x20] sm:$0xff]
    %v30 = vld [vmem:[#allocation2 + $0x28] sm:$0xff]
    %v31 = vld [vmem:[#allocation2 + $0x30] sm:$0xff]
    %v32 = vld [vmem:[#allocation2 + $0x38] sm:$0xff]
    %v33 = vld [vmem:[#allocation2 + $0x40] sm:$0xff]
    %v34 = vld [vmem:[#allocation2 + $0x48] sm:$0xff]
    %v35 = vld [vmem:[#allocation2 + $0x50] sm:$0xff]
    %v36 = vld [vmem:[#allocation2 + $0x58] sm:$0xff]
    %v37 = vld [vmem:[#allocation2 + $0x60] sm:$0xff]
    %v38 = vld [vmem:[#allocation2 + $0x68] sm:$0xff]
    %v39 = vld [vmem:[#allocation2 + $0x70] sm:$0xff]
    %v40 = vld [vmem:[#allocation2 + $0x78] sm:$0xff]
    %v41 = vmul.f32 %v25, %v25
    %v42 = vmul.f32 %v26, %v26
    %v43 = vmul.f32 %v27, %v27
    %v44 = vmul.f32 %v28, %v28
    %v45 = vmul.f32 %v29, %v29
    %v46 = vmul.f32 %v30, %v30
    %v47 = vmul.f32 %v31, %v31
    %v48 = vmul.f32 %v32, %v32
    %v49 = vmul.f32 %v33, %v33
    %v50 = vmul.f32 %v34, %v34
    %v51 = vmul.f32 %v35, %v35
    %v52 = vmul.f32 %v36, %v36
    %v53 = vmul.f32 %v37, %v37
    %v54 = vmul.f32 %v38, %v38
    %v55 = vmul.f32 %v39, %v39
    %v56 = vmul.f32 %v40, %v40
    %57 = vadd.xlane.f32.xlu0 %v41
    %v58 = vpop.xlane.xlu0 %57
    %59 = vadd.xlane.f32.xlu0 %v42
    %v60 = vpop.xlane.xlu0 %59
    %61 = vadd.xlane.f32.xlu0 %v43
    %v62 = vpop.xlane.xlu0 %61
    %63 = vadd.xlane.f32.xlu0 %v44
    %v64 = vpop.xlane.xlu0 %63
    %65 = vadd.xlane.f32.xlu0 %v45
    %v66 = vpop.xlane.xlu0 %65
    %67 = vadd.xlane.f32.xlu0 %v46
    %v68 = vpop.xlane.xlu0 %67
    %69 = vadd.xlane.f32.xlu0 %v47
    %v70 = vpop.xlane.xlu0 %69
    %71 = vadd.xlane.f32.xlu0 %v48
    %v72 = vpop.xlane.xlu0 %71
    %73 = vadd.xlane.f32.xlu0 %v49
    %v74 = vpop.xlane.xlu0 %73
    %75 = vadd.xlane.f32.xlu0 %v50
    %v76 = vpop.xlane.xlu0 %75
    %77 = vadd.xlane.f32.xlu0 %v51
    %v78 = vpop.xlane.xlu0 %77
    %79 = vadd.xlane.f32.xlu0 %v52
    %v80 = vpop.xlane.xlu0 %79
    %81 = vadd.xlane.f32.xlu0 %v53
    %v82 = vpop.xlane.xlu0 %81
    %83 = vadd.xlane.f32.xlu0 %v54
    %v84 = vpop.xlane.xlu0 %83
    %85 = vadd.xlane.f32.xlu0 %v55
    %v86 = vpop.xlane.xlu0 %85
    %87 = vadd.xlane.f32.xlu0 %v56
    %v88 = vpop.xlane.xlu0 %87
    %v89 = vmax.f32 %v58, 1e-24
    %v90 = vmax.f32 %v60, 1e-24
    %v91 = vmax.f32 %v62, 1e-24
    %v92 = vmax.f32 %v64, 1e-24
    %v93 = vmax.f32 %v66, 1e-24
    %v94 = vmax.f32 %v68, 1e-24
    %v95 = vmax.f32 %v70, 1e-24
    %v96 = vmax.f32 %v72, 1e-24
    %v97 = vmax.f32 %v74, 1e-24
    %v98 = vmax.f32 %v76, 1e-24
    %v99 = vmax.f32 %v78, 1e-24
    %v100 = vmax.f32 %v80, 1e-24
    %v101 = vmax.f32 %v82, 1e-24
    %v102 = vmax.f32 %v84, 1e-24
    %v103 = vmax.f32 %v86, 1e-24
    %v104 = vmax.f32 %v88, 1e-24
    %v105 = vrsqrt.pop %v89
    %v106 = vmul.f32 %v105, %v89
    %v107 = vmul.f32 %v106, %v105
    %v108 = vmul.f32 0.5, %v107
    %v109 = vsub.f32 1.5, %v108
    %v110 = vmul.f32 %v105, %v109
    %vm111 = vweird.f32 %v89
    %vm112 = vweird.f32 %v105
    %vm113 = vmor %vm111, %vm112
    %v114 = vsel %vm113, %v105, %v110
    %v115 = vrsqrt.pop %v90
    %v116 = vmul.f32 %v115, %v90
    %v117 = vmul.f32 %v116, %v115
    %v118 = vmul.f32 0.5, %v117
    %v119 = vsub.f32 1.5, %v118
    %v120 = vmul.f32 %v115, %v119
    %vm121 = vweird.f32 %v90
    %vm122 = vweird.f32 %v115
    %vm123 = vmor %vm121, %vm122
    %v124 = vsel %vm123, %v115, %v120
    %v125 = vrsqrt.pop %v91
    %v126 = vmul.f32 %v125, %v91
    %v127 = vmul.f32 %v126, %v125
    %v128 = vmul.f32 0.5, %v127
    %v129 = vsub.f32 1.5, %v128
    %v130 = vmul.f32 %v125, %v129
    %vm131 = vweird.f32 %v91
    %vm132 = vweird.f32 %v125
    %vm133 = vmor %vm131, %vm132
    %v134 = vsel %vm133, %v125, %v130
    %v135 = vrsqrt.pop %v92
    %v136 = vmul.f32 %v135, %v92
    %v137 = vmul.f32 %v136, %v135
    %v138 = vmul.f32 0.5, %v137
    %v139 = vsub.f32 1.5, %v138
    %v140 = vmul.f32 %v135, %v139
    %vm141 = vweird.f32 %v92
    %vm142 = vweird.f32 %v135
    %vm143 = vmor %vm141, %vm142
    %v144 = vsel %vm143, %v135, %v140
    %v145 = vrsqrt.pop %v93
    %v146 = vmul.f32 %v145, %v93
    %v147 = vmul.f32 %v146, %v145
    %v148 = vmul.f32 0.5, %v147
    %v149 = vsub.f32 1.5, %v148
    %v150 = vmul.f32 %v145, %v149
    %vm151 = vweird.f32 %v93
    %vm152 = vweird.f32 %v145
    %vm153 = vmor %vm151, %vm152
    %v154 = vsel %vm153, %v145, %v150
    %v155 = vrsqrt.pop %v94
    %v156 = vmul.f32 %v155, %v94
    %v157 = vmul.f32 %v156, %v155
    %v158 = vmul.f32 0.5, %v157
    %v159 = vsub.f32 1.5, %v158
    %v160 = vmul.f32 %v155, %v159
    %vm161 = vweird.f32 %v94
    %vm162 = vweird.f32 %v155
    %vm163 = vmor %vm161, %vm162
    %v164 = vsel %vm163, %v155, %v160
    %v165 = vrsqrt.pop %v95
    %v166 = vmul.f32 %v165, %v95
    %v167 = vmul.f32 %v166, %v165
    %v168 = vmul.f32 0.5, %v167
    %v169 = vsub.f32 1.5, %v168
    %v170 = vmul.f32 %v165, %v169
    %vm171 = vweird.f32 %v95
    %vm172 = vweird.f32 %v165
    %vm173 = vmor %vm171, %vm172
    %v174 = vsel %vm173, %v165, %v170
    %v175 = vrsqrt.pop %v96
    %v176 = vmul.f32 %v175, %v96
    %v177 = vmul.f32 %v176, %v175
    %v178 = vmul.f32 0.5, %v177
    %v179 = vsub.f32 1.5, %v178
    %v180 = vmul.f32 %v175, %v179
    %vm181 = vweird.f32 %v96
    %vm182 = vweird.f32 %v175
    %vm183 = vmor %vm181, %vm182
    %v184 = vsel %vm183, %v175, %v180
    %v185 = vrsqrt.pop %v97
    %v186 = vmul.f32 %v185, %v97
    %v187 = vmul.f32 %v186, %v185
    %v188 = vmul.f32 0.5, %v187
    %v189 = vsub.f32 1.5, %v188
    %v190 = vmul.f32 %v185, %v189
    %vm191 = vweird.f32 %v97
    %vm192 = vweird.f32 %v185
    %vm193 = vmor %vm191, %vm192
    %v194 = vsel %vm193, %v185, %v190
    %v195 = vrsqrt.pop %v98
    %v196 = vmul.f32 %v195, %v98
    %v197 = vmul.f32 %v196, %v195
    %v198 = vmul.f32 0.5, %v197
    %v199 = vsub.f32 1.5, %v198
    %v200 = vmul.f32 %v195, %v199
    %vm201 = vweird.f32 %v98
    %vm202 = vweird.f32 %v195
    %vm203 = vmor %vm201, %vm202
    %v204 = vsel %vm203, %v195, %v200
    %v205 = vrsqrt.pop %v99
    %v206 = vmul.f32 %v205, %v99
    %v207 = vmul.f32 %v206, %v205
    %v208 = vmul.f32 0.5, %v207
    %v209 = vsub.f32 1.5, %v208
    %v210 = vmul.f32 %v205, %v209
    %vm211 = vweird.f32 %v99
    %vm212 = vweird.f32 %v205
    %vm213 = vmor %vm211, %vm212
    %v214 = vsel %vm213, %v205, %v210
    %v215 = vrsqrt.pop %v100
    %v216 = vmul.f32 %v215, %v100
    %v217 = vmul.f32 %v216, %v215
    %v218 = vmul.f32 0.5, %v217
    %v219 = vsub.f32 1.5, %v218
    %v220 = vmul.f32 %v215, %v219
    %vm221 = vweird.f32 %v100
    %vm222 = vweird.f32 %v215
    %vm223 = vmor %vm221, %vm222
    %v224 = vsel %vm223, %v215, %v220
    %v225 = vrsqrt.pop %v101
    %v226 = vmul.f32 %v225, %v101
    %v227 = vmul.f32 %v226, %v225
    %v228 = vmul.f32 0.5, %v227
    %v229 = vsub.f32 1.5, %v228
    %v230 = vmul.f32 %v225, %v229
    %vm231 = vweird.f32 %v101
    %vm232 = vweird.f32 %v225
    %vm233 = vmor %vm231, %vm232
    %v234 = vsel %vm233, %v225, %v230
    %v235 = vrsqrt.pop %v102
    %v236 = vmul.f32 %v235, %v102
    %v237 = vmul.f32 %v236, %v235
    %v238 = vmul.f32 0.5, %v237
    %v239 = vsub.f32 1.5, %v238
    %v240 = vmul.f32 %v235, %v239
    %vm241 = vweird.f32 %v102
    %vm242 = vweird.f32 %v235
    %vm243 = vmor %vm241, %vm242
    %v244 = vsel %vm243, %v235, %v240
    %v245 = vrsqrt.pop %v103
    %v246 = vmul.f32 %v245, %v103
    %v247 = vmul.f32 %v246, %v245
    %v248 = vmul.f32 0.5, %v247
    %v249 = vsub.f32 1.5, %v248
    %v250 = vmul.f32 %v245, %v249
    %vm251 = vweird.f32 %v103
    %vm252 = vweird.f32 %v245
    %vm253 = vmor %vm251, %vm252
    %v254 = vsel %vm253, %v245, %v250
    %v255 = vrsqrt.pop %v104
    %v256 = vmul.f32 %v255, %v104
    %v257 = vmul.f32 %v256, %v255
    %v258 = vmul.f32 0.5, %v257
    %v259 = vsub.f32 1.5, %v258
    %v260 = vmul.f32 %v255, %v259
    %vm261 = vweird.f32 %v104
    %vm262 = vweird.f32 %v255
    %vm263 = vmor %vm261, %vm262
    %v264 = vsel %vm263, %v255, %v260
    %v265 = vmul.f32 %v25, %v114
    %v266 = vmul.f32 %v26, %v124
    %v267 = vmul.f32 %v27, %v134
    %v268 = vmul.f32 %v28, %v144
    %v269 = vmul.f32 %v29, %v154
    %v270 = vmul.f32 %v30, %v164
    %v271 = vmul.f32 %v31, %v174
    %v272 = vmul.f32 %v32, %v184
    %v273 = vmul.f32 %v33, %v194
    %v274 = vmul.f32 %v34, %v204
    %v275 = vmul.f32 %v35, %v214
    %v276 = vmul.f32 %v36, %v224
    %v277 = vmul.f32 %v37, %v234
    %v278 = vmul.f32 %v38, %v244
    %v279 = vmul.f32 %v39, %v254
    %v280 = vmul.f32 %v40, %v264
    %v281 = vpack.c.bf16 %v265, %v265
    %v282 = vpack.c.bf16 %v266, %v266
    %v283 = vpack.c.bf16 %v267, %v267
    %v284 = vpack.c.bf16 %v268, %v268
    %v285 = vpack.c.bf16 %v269, %v269
    %v286 = vpack.c.bf16 %v270, %v270
    %v287 = vpack.c.bf16 %v271, %v271
    %v288 = vpack.c.bf16 %v272, %v272
    %v289 = vpack.c.bf16 %v273, %v273
    %v290 = vpack.c.bf16 %v274, %v274
    %v291 = vpack.c.bf16 %v275, %v275
    %v292 = vpack.c.bf16 %v276, %v276
    %v293 = vpack.c.bf16 %v277, %v277
    %v294 = vpack.c.bf16 %v278, %v278
    %v295 = vpack.c.bf16 %v279, %v279
    %v296 = vpack.c.bf16 %v280, %v280
    %297 = vst [vmem:[#allocation5] sm:$0xf] %v281
    %298 = vst [vmem:[#allocation5 + $0x4] sm:$0xf] %v282
    %299 = vst [vmem:[#allocation5 + $0x8] sm:$0xf] %v283
    %300 = vst [vmem:[#allocation5 + $0xc] sm:$0xf] %v284
    %301 = vst [vmem:[#allocation5 + $0x10] sm:$0xf] %v285
    %302 = vst [vmem:[#allocation5 + $0x14] sm:$0xf] %v286
    %303 = vst [vmem:[#allocation5 + $0x18] sm:$0xf] %v287
    %304 = vst [vmem:[#allocation5 + $0x1c] sm:$0xf] %v288
    %305 = vst [vmem:[#allocation5 + $0x20] sm:$0xf] %v289
    %306 = vst [vmem:[#allocation5 + $0x24] sm:$0xf] %v290
    %307 = vst [vmem:[#allocation5 + $0x28] sm:$0xf] %v291
    %308 = vst [vmem:[#allocation5 + $0x2c] sm:$0xf] %v292
    %309 = vst [vmem:[#allocation5 + $0x30] sm:$0xf] %v293
    %310 = vst [vmem:[#allocation5 + $0x34] sm:$0xf] %v294
    %311 = vst [vmem:[#allocation5 + $0x38] sm:$0xf] %v295
    %312 = vst [vmem:[#allocation5 + $0x3c] sm:$0xf] %v296
    // Predicated region
    $region10: #{tpu_custom_call.1} parent=1 // pred_check
      _
    $region11: #{tpu_custom_call.1} parent=1 // pred_check_branch
      %314 = sbr.rel (0) target = $region13
    $region12: #{tpu_custom_call.1} parent=1 // pred_region
      %316 = vsyncadd [#allocation4], 0
      %s317 = sshll.u32 [#allocation5], 4
      %s318 = int_to_ptr.vmem [resolvable:$true] %s317
      %s319 = sshll.u32 %s1, 4
      %s320 = int_to_ptr.hbm [resolvable:$true] %s319
      %325 = dma.vmem_to_hbm [thread:$0]  %s318, 1024, %s320, [#allocation4], 64, 64, 4
    $region13: #{tpu_custom_call.1} parent=1 // pred_fallthru
      _
    // Predicated region
    $region14: #{tpu_custom_call.1} parent=1 // pred_check
      _
    $region15: #{tpu_custom_call.1} parent=1 // pred_check_branch
      %327 = sbr.rel (0) target = $region17
    $region16: #{tpu_custom_call.1} parent=1 // pred_region
      %329 = dma.done [#allocation4], 1024
    $region17: #{tpu_custom_call.1} parent=1 // pred_fallthru
      _
    %330 = vsyncpa [#allocation3], 1
    %331 = vsyncpa [#allocation4], 1

</llo_original>
